<compile_context>
chip_gen: v7x
topology: tpu7x:2x2x1
jax: 0.10.0
libtpu: 0.0.40
codegen_flags: <defaults>
</compile_context>

<pallas_src>
import functools

import jax
import jax.numpy as jnp
from jax.experimental import pallas as pl
from jax.experimental.pallas import tpu as pltpu  # noqa: F401  (not needed at this size)

# ----------------------------- config -----------------------------
DIM = 32          # model dim
HEADS = 4
DIM_HEAD = 16
INNER = HEADS * DIM_HEAD      # 64
SCALE = DIM_HEAD ** (-0.5)
LN_EPS = 1e-5
BATCH = 2
SEQ = 8

# MXU operand dtype: bf16 is native on v5e/v6e/v7x; f32 would multi-pass the MXU.
# Elementwise (LayerNorm / softmax) math is always f32 regardless of this switch.
MM_DTYPE = jnp.bfloat16


# ----------------------------- kernel -----------------------------
def mha_kernel(x_ref, w_ref, vec_ref, o_ref, *,
               heads, dim_head, scale, eps, seq, mm_dtype):
    inner = heads * dim_head
    rows = x_ref.shape[0]
    dim = x_ref.shape[1]

    x = x_ref[...].astype(jnp.float32)                        # (B*S, D)

    # --- LayerNorm over last dim (f32, VPU/EUP) ---
    g = vec_ref[0:1, 0:dim].astype(jnp.float32)               # (1, D)
    b = vec_ref[1:2, 0:dim].astype(jnp.float32)               # (1, D)
    mean = jnp.mean(x, axis=-1, keepdims=True)
    var = jnp.mean((x - mean) ** 2, axis=-1, keepdims=True)
    xn = (x - mean) * jax.lax.rsqrt(var + eps)
    xn = xn * g + b

    # --- Fused q|k|v projection: one (B*S, D) @ (D, 3*inner) MXU matmul ---
    wqkv = w_ref[:, 0:3 * inner]                               # (D, 3*inner)
    bqkv = vec_ref[2:3, 0:3 * inner].astype(jnp.float32)       # (1, 3*inner)
    qkv = jnp.dot(xn.astype(mm_dtype), wqkv.astype(mm_dtype),
                  preferred_element_type=jnp.float32)
    qkv = qkv + bqkv
    q = qkv[:, 0:inner] * scale                                # scale q once, not per head
    k = qkv[:, inner:2 * inner]
    v = qkv[:, 2 * inner:3 * inner]

    # Wo transposed lives in the same weight slab: (D, inner).
    woT = w_ref[:, 3 * inner:4 * inner]

    # --- In-kernel block-diagonal bias: rows only attend within their batch ---
    row_ids = jax.lax.broadcasted_iota(jnp.int32, (rows, rows), 0)
    col_ids = jax.lax.broadcasted_iota(jnp.int32, (rows, rows), 1)
    if seq & (seq - 1) == 0:                                   # power-of-two seq: shift
        shift = seq.bit_length() - 1
        rb, cb = row_ids >> shift, col_ids >> shift
    else:
        rb, cb = row_ids // seq, col_ids // seq
    neg_bias = jnp.where(rb == cb, 0.0, -1e9).astype(jnp.float32)

    # --- Per-head attention, projected straight into the output basis ---
    partials = []
    for h in range(heads):                                     # static unroll (4)
        sl = slice(h * dim_head, (h + 1) * dim_head)
        qh, kh, vh = q[:, sl], k[:, sl], v[:, sl]              # (B*S, dh) each
        # scores = qh @ kh^T without materializing a transpose
        s = jax.lax.dot_general(
            qh.astype(mm_dtype), kh.astype(mm_dtype),
            (((1,), (1,)), ((), ())),
            preferred_element_type=jnp.float32)
        s = s + neg_bias                                       # keep attention within batch
        s = s - jnp.max(s, axis=-1, keepdims=True)
        p = jnp.exp(s)
        p = p * pl.reciprocal(jnp.sum(p, axis=-1, keepdims=True), approx=True)
        hv = jnp.dot(p.astype(mm_dtype), vh.astype(mm_dtype),
                     preferred_element_type=jnp.float32)       # (B*S, dh)
        # hv @ Wo[sl, :] == dot_general(hv, WoT[:, sl]) contracting last-vs-last
        # (equivalent to concat(head outputs) @ Wo, without the lane concat).
        partials.append(jax.lax.dot_general(
            hv.astype(mm_dtype), woT[:, sl].astype(mm_dtype),
            (((1,), (1,)), ((), ())),
            preferred_element_type=jnp.float32))               # (B*S, D)

    # Tree-sum the independent per-head partials (breaks the serial add chain).
    while len(partials) > 1:
        nxt = [partials[i] + partials[i + 1] for i in range(0, len(partials) - 1, 2)]
        if len(partials) % 2:
            nxt.append(partials[-1])
        partials = nxt
    acc = partials[0]

    bo = vec_ref[3:4, 0:dim].astype(jnp.float32)               # (1, D)
    o_ref[...] = (acc + bo).astype(o_ref.dtype)


# ----------------------------- param packing (runs ONCE, off the hot path) -----------------------------
def pack_params(params):
    """Fuse the 10 raw parameters into two slabs, computed once at init time."""
    gamma, beta, wq, bq, wk, bk, wv, bv, wo, bo = params
    dim = gamma.shape[0]
    inner = wq.shape[1]
    width = 3 * inner

    # [Wq | Wk | Wv | Wo^T]  ->  (dim, 4*inner): one weight DMA, lane-dense load.
    w_slab = jnp.concatenate([wq, wk, wv, wo.T], axis=1).astype(jnp.float32)

    def pad(vec):
        return jnp.pad(vec, (0, width - vec.shape[0]))

    # [gamma | beta | bqkv | bo]  ->  (4, 3*inner): one small-vector DMA.
    vec_slab = jnp.stack(
        [pad(gamma), pad(beta), jnp.concatenate([bq, bk, bv]), pad(bo)],
        axis=0).astype(jnp.float32)
    return w_slab, vec_slab


# ----------------------------- wrapper (per-call path) -----------------------------
@jax.jit
def mha_pallas(x, w_slab, vec_slab):
    B, S, D = x.shape
    rows = B * S
    x2 = x.reshape(rows, D)

    kernel = functools.partial(
        mha_kernel, heads=HEADS, dim_head=DIM_HEAD, scale=SCALE,
        eps=LN_EPS, seq=S, mm_dtype=MM_DTYPE)

    out2 = pl.pallas_call(
        kernel,
        out_shape=jax.ShapeDtypeStruct((rows, D), x.dtype),
        # No grid: single invocation; every operand is a full-array VMEM block
        # (~35 KiB total), loaded exactly once.  See header comment for the
        # row-grid scaling path (v7x second TensorCore) once rows grow.
    )(x2, w_slab, vec_slab)

    return out2.reshape(B, S, D)


# ----------------------------- reference (plain JAX) -----------------------------
def mha_reference(x, params):
    gamma, beta, wq, bq, wk, bk, wv, bv, wo, bo = params
    B, S, D = x.shape
    mean = jnp.mean(x, axis=-1, keepdims=True)
    var = jnp.mean((x - mean) ** 2, axis=-1, keepdims=True)
    xn = (x - mean) / jnp.sqrt(var + LN_EPS) * gamma + beta
    q = xn @ wq + bq
    k = xn @ wk + bk
    v = xn @ wv + bv
    q = q.reshape(B, S, HEADS, DIM_HEAD).transpose(0, 2, 1, 3)
    k = k.reshape(B, S, HEADS, DIM_HEAD).transpose(0, 2, 1, 3)
    v = v.reshape(B, S, HEADS, DIM_HEAD).transpose(0, 2, 1, 3)
    scores = jnp.einsum('bhqd,bhkd->bhqk', q, k) * SCALE
    probs = jax.nn.softmax(scores, axis=-1)
    out = jnp.einsum('bhqk,bhkd->bhqd', probs, v)
    out = out.transpose(0, 2, 1, 3).reshape(B, S, INNER)
    return out @ wo + bo


# ----------------------------- main -----------------------------
if __name__ == "__main__":
    key = jax.random.PRNGKey(0)
    keys = jax.random.split(key, 10)

    x = jax.random.normal(keys[0], (BATCH, SEQ, DIM), dtype=jnp.float32)

    # Deterministic parameter init (synthetic weights, not a checkpoint load).
    # Linear weights stored as [in_features, out_features] (y = x @ W + b).
    gamma = jnp.ones((DIM,), jnp.float32)
    beta = jnp.zeros((DIM,), jnp.float32)
    wq = 0.1 * jax.random.normal(keys[1], (DIM, INNER), jnp.float32)
    bq = 0.1 * jax.random.normal(keys[2], (INNER,), jnp.float32)
    wk = 0.1 * jax.random.normal(keys[3], (DIM, INNER), jnp.float32)
    bk = 0.1 * jax.random.normal(keys[4], (INNER,), jnp.float32)
    wv = 0.1 * jax.random.normal(keys[5], (DIM, INNER), jnp.float32)
    bv = 0.1 * jax.random.normal(keys[6], (INNER,), jnp.float32)
    wo = 0.1 * jax.random.normal(keys[7], (INNER, DIM), jnp.float32)
    bo = 0.1 * jax.random.normal(keys[8], (DIM,), jnp.float32)

    params = (gamma, beta, wq, bq, wk, bk, wv, bv, wo, bo)

    # Pack once (off the per-call path) — the Pallas call only sees fused slabs.
    w_slab, vec_slab = pack_params(params)
    w_slab, vec_slab = jax.block_until_ready((w_slab, vec_slab))

    out = mha_pallas(x, w_slab, vec_slab)
    out = jax.block_until_ready(out)

    ref = mha_reference(x, params)
    assert out.shape == (BATCH, SEQ, DIM)
    # Tolerance covers bf16 MXU operands (accumulation in f32) plus the EUP
    # approximate reciprocal in the softmax denominator.
    if not jnp.allclose(out, ref, atol=2e-2, rtol=2e-2):
        raise AssertionError("Pallas output does not match JAX reference")

    print("KERNEL_OK")
</pallas_src>

<mosaic_0001>
module attributes {stable_mosaic.version = 11 : i64} {
  func.func @mha_kernel(%arg0: memref<16x32xf32, #tpu.memory_space<vmem>>, %arg1: memref<32x256xf32, #tpu.memory_space<vmem>>, %arg2: memref<4x192xf32, #tpu.memory_space<vmem>>, %arg3: memref<16x32xf32, #tpu.memory_space<vmem>>) attributes {dimension_semantics = [], scalar_prefetch = 0 : i64, scratch_operands = 0 : i64, tpu.core_type = #tpu.core_type<tc>} {
    %c0 = arith.constant 0 : index
    %c0_0 = arith.constant 0 : index
    %0 = vector.load %arg0[%c0, %c0_0] : memref<16x32xf32, #tpu.memory_space<vmem>>, vector<16x32xf32>
    %c0_1 = arith.constant 0 : index
    %c0_2 = arith.constant 0 : index
    %1 = vector.load %arg2[%c0_1, %c0_2] : memref<4x192xf32, #tpu.memory_space<vmem>>, vector<1x32xf32>
    %c1 = arith.constant 1 : index
    %c0_3 = arith.constant 0 : index
    %2 = vector.load %arg2[%c1, %c0_3] : memref<4x192xf32, #tpu.memory_space<vmem>>, vector<1x32xf32>
    %cst = arith.constant dense<0.000000e+00> : vector<16xf32>
    %3 = vector.multi_reduction <add>, %0, %cst [1] : vector<16x32xf32> to vector<16xf32>
    %4 = vector.shape_cast %3 : vector<16xf32> to vector<16x1xf32>
    %cst_4 = arith.constant 3.200000e+01 : f32
    %5 = vector.broadcast %cst_4 : f32 to vector<16x1xf32>
    %6 = arith.divf %4, %5 : vector<16x1xf32>
    %7 = vector.broadcast %6 : vector<16x1xf32> to vector<16x32xf32>
    %8 = arith.subf %0, %7 : vector<16x32xf32>
    %9 = arith.mulf %8, %8 : vector<16x32xf32>
    %cst_5 = arith.constant dense<0.000000e+00> : vector<16xf32>
    %10 = vector.multi_reduction <add>, %9, %cst_5 [1] : vector<16x32xf32> to vector<16xf32>
    %11 = vector.shape_cast %10 : vector<16xf32> to vector<16x1xf32>
    %cst_6 = arith.constant 3.200000e+01 : f32
    %12 = vector.broadcast %cst_6 : f32 to vector<16x1xf32>
    %13 = arith.divf %11, %12 : vector<16x1xf32>
    %14 = vector.broadcast %6 : vector<16x1xf32> to vector<16x32xf32>
    %15 = arith.subf %0, %14 : vector<16x32xf32>
    %cst_7 = arith.constant 9.99999974E-6 : f32
    %16 = vector.broadcast %cst_7 : f32 to vector<16x1xf32>
    %17 = arith.addf %13, %16 : vector<16x1xf32>
    %18 = math.rsqrt %17 : vector<16x1xf32>
    %19 = vector.broadcast %18 : vector<16x1xf32> to vector<16x32xf32>
    %20 = arith.mulf %15, %19 : vector<16x32xf32>
    %21 = vector.broadcast %1 : vector<1x32xf32> to vector<16x32xf32>
    %22 = arith.mulf %20, %21 : vector<16x32xf32>
    %23 = vector.broadcast %2 : vector<1x32xf32> to vector<16x32xf32>
    %24 = arith.addf %22, %23 : vector<16x32xf32>
    %c0_8 = arith.constant 0 : index
    %c0_9 = arith.constant 0 : index
    %25 = vector.load %arg1[%c0_8, %c0_9] : memref<32x256xf32, #tpu.memory_space<vmem>>, vector<32x192xf32>
    %c2 = arith.constant 2 : index
    %c0_10 = arith.constant 0 : index
    %26 = vector.load %arg2[%c2, %c0_10] : memref<4x192xf32, #tpu.memory_space<vmem>>, vector<1x192xf32>
    %27 = arith.truncf %24 : vector<16x32xf32> to vector<16x32xbf16>
    %28 = arith.truncf %25 : vector<32x192xf32> to vector<32x192xbf16>
    %cst_11 = arith.constant dense<0.000000e+00> : vector<16x192xf32>
    %29 = tpu.matmul %27, %28, %cst_11 {dimension_numbers = #tpu.dot_dimension_numbers<[1], [0], [0], [1], [0, 0, 1, 1], [], []>} : vector<16x32xbf16>, vector<32x192xbf16>, vector<16x192xf32> -> vector<16x192xf32>
    %30 = vector.broadcast %26 : vector<1x192xf32> to vector<16x192xf32>
    %31 = arith.addf %29, %30 : vector<16x192xf32>
    %32 = vector.extract_strided_slice %31 {offsets = [0, 0], sizes = [16, 64], strides = [1, 1]} : vector<16x192xf32> to vector<16x64xf32>
    %cst_12 = arith.constant 2.500000e-01 : f32
    %33 = vector.broadcast %cst_12 : f32 to vector<16x64xf32>
    %34 = arith.mulf %32, %33 : vector<16x64xf32>
    %35 = vector.extract_strided_slice %31 {offsets = [0, 64], sizes = [16, 64], strides = [1, 1]} : vector<16x192xf32> to vector<16x64xf32>
    %36 = vector.extract_strided_slice %31 {offsets = [0, 128], sizes = [16, 64], strides = [1, 1]} : vector<16x192xf32> to vector<16x64xf32>
    %c0_13 = arith.constant 0 : index
    %c192 = arith.constant 192 : index
    %37 = vector.load %arg1[%c0_13, %c192] : memref<32x256xf32, #tpu.memory_space<vmem>>, vector<32x64xf32>
    %38 = tpu.iota {dimensions = array<i32: 0>} : vector<16x16xi32>
    %39 = tpu.iota {dimensions = array<i32: 1>} : vector<16x16xi32>
    %c3_i32 = arith.constant 3 : i32
    %40 = vector.broadcast %c3_i32 : i32 to vector<16x16xi32>
    %41 = arith.shrsi %38, %40 : vector<16x16xi32>
    %c3_i32_14 = arith.constant 3 : i32
    %42 = vector.broadcast %c3_i32_14 : i32 to vector<16x16xi32>
    %43 = arith.shrsi %39, %42 : vector<16x16xi32>
    %44 = arith.cmpi eq, %41, %43 : vector<16x16xi32>
    %cst_15 = arith.constant 0.000000e+00 : f32
    %cst_16 = arith.constant -1.000000e+09 : f32
    %45 = vector.broadcast %cst_15 : f32 to vector<16x16xf32>
    %46 = vector.broadcast %cst_16 : f32 to vector<16x16xf32>
    %47 = arith.select %44, %45, %46 : vector<16x16xi1>, vector<16x16xf32>
    %48 = vector.extract_strided_slice %34 {offsets = [0, 0], sizes = [16, 16], strides = [1, 1]} : vector<16x64xf32> to vector<16x16xf32>
    %49 = vector.extract_strided_slice %35 {offsets = [0, 0], sizes = [16, 16], strides = [1, 1]} : vector<16x64xf32> to vector<16x16xf32>
    %50 = vector.extract_strided_slice %36 {offsets = [0, 0], sizes = [16, 16], strides = [1, 1]} : vector<16x64xf32> to vector<16x16xf32>
    %51 = arith.truncf %48 : vector<16x16xf32> to vector<16x16xbf16>
    %52 = arith.truncf %49 : vector<16x16xf32> to vector<16x16xbf16>
    %cst_17 = arith.constant dense<0.000000e+00> : vector<16x16xf32>
    %53 = tpu.matmul %51, %52, %cst_17 {dimension_numbers = #tpu.dot_dimension_numbers<[1], [1], [0], [0], [0, 0, 1, 0], [], []>} : vector<16x16xbf16>, vector<16x16xbf16>, vector<16x16xf32> -> vector<16x16xf32>
    %54 = arith.addf %53, %47 : vector<16x16xf32>
    %cst_18 = arith.constant dense<0xFF800000> : vector<16xf32>
    %55 = vector.multi_reduction <maximumf>, %54, %cst_18 [1] : vector<16x16xf32> to vector<16xf32>
    %56 = vector.shape_cast %55 : vector<16xf32> to vector<16x1xf32>
    %57 = vector.broadcast %56 : vector<16x1xf32> to vector<16x16xf32>
    %58 = arith.subf %54, %57 : vector<16x16xf32>
    %59 = math.exp %58 : vector<16x16xf32>
    %cst_19 = arith.constant dense<0.000000e+00> : vector<16xf32>
    %60 = vector.multi_reduction <add>, %59, %cst_19 [1] : vector<16x16xf32> to vector<16xf32>
    %61 = vector.shape_cast %60 : vector<16xf32> to vector<16x1xf32>
    %62 = tpu.reciprocal %61 {approx = true} : vector<16x1xf32> -> vector<16x1xf32>
    %63 = vector.broadcast %62 : vector<16x1xf32> to vector<16x16xf32>
    %64 = arith.mulf %59, %63 : vector<16x16xf32>
    %65 = arith.truncf %64 : vector<16x16xf32> to vector<16x16xbf16>
    %66 = arith.truncf %50 : vector<16x16xf32> to vector<16x16xbf16>
    %cst_20 = arith.constant dense<0.000000e+00> : vector<16x16xf32>
    %67 = tpu.matmul %65, %66, %cst_20 {dimension_numbers = #tpu.dot_dimension_numbers<[1], [0], [0], [1], [0, 0, 1, 1], [], []>} : vector<16x16xbf16>, vector<16x16xbf16>, vector<16x16xf32> -> vector<16x16xf32>
    %68 = arith.truncf %67 : vector<16x16xf32> to vector<16x16xbf16>
    %69 = vector.extract_strided_slice %37 {offsets = [0, 0], sizes = [32, 16], strides = [1, 1]} : vector<32x64xf32> to vector<32x16xf32>
    %70 = arith.truncf %69 : vector<32x16xf32> to vector<32x16xbf16>
    %cst_21 = arith.constant dense<0.000000e+00> : vector<16x32xf32>
    %71 = tpu.matmul %68, %70, %cst_21 {dimension_numbers = #tpu.dot_dimension_numbers<[1], [1], [0], [0], [0, 0, 1, 0], [], []>} : vector<16x16xbf16>, vector<32x16xbf16>, vector<16x32xf32> -> vector<16x32xf32>
    %72 = vector.extract_strided_slice %34 {offsets = [0, 16], sizes = [16, 16], strides = [1, 1]} : vector<16x64xf32> to vector<16x16xf32>
    %73 = vector.extract_strided_slice %35 {offsets = [0, 16], sizes = [16, 16], strides = [1, 1]} : vector<16x64xf32> to vector<16x16xf32>
    %74 = vector.extract_strided_slice %36 {offsets = [0, 16], sizes = [16, 16], strides = [1, 1]} : vector<16x64xf32> to vector<16x16xf32>
    %75 = arith.truncf %72 : vector<16x16xf32> to vector<16x16xbf16>
    %76 = arith.truncf %73 : vector<16x16xf32> to vector<16x16xbf16>
    %cst_22 = arith.constant dense<0.000000e+00> : vector<16x16xf32>
    %77 = tpu.matmul %75, %76, %cst_22 {dimension_numbers = #tpu.dot_dimension_numbers<[1], [1], [0], [0], [0, 0, 1, 0], [], []>} : vector<16x16xbf16>, vector<16x16xbf16>, vector<16x16xf32> -> vector<16x16xf32>
    %78 = arith.addf %77, %47 : vector<16x16xf32>
    %cst_23 = arith.constant dense<0xFF800000> : vector<16xf32>
    %79 = vector.multi_reduction <maximumf>, %78, %cst_23 [1] : vector<16x16xf32> to vector<16xf32>
    %80 = vector.shape_cast %79 : vector<16xf32> to vector<16x1xf32>
    %81 = vector.broadcast %80 : vector<16x1xf32> to vector<16x16xf32>
    %82 = arith.subf %78, %81 : vector<16x16xf32>
    %83 = math.exp %82 : vector<16x16xf32>
    %cst_24 = arith.constant dense<0.000000e+00> : vector<16xf32>
    %84 = vector.multi_reduction <add>, %83, %cst_24 [1] : vector<16x16xf32> to vector<16xf32>
    %85 = vector.shape_cast %84 : vector<16xf32> to vector<16x1xf32>
    %86 = tpu.reciprocal %85 {approx = true} : vector<16x1xf32> -> vector<16x1xf32>
    %87 = vector.broadcast %86 : vector<16x1xf32> to vector<16x16xf32>
    %88 = arith.mulf %83, %87 : vector<16x16xf32>
    %89 = arith.truncf %88 : vector<16x16xf32> to vector<16x16xbf16>
    %90 = arith.truncf %74 : vector<16x16xf32> to vector<16x16xbf16>
    %cst_25 = arith.constant dense<0.000000e+00> : vector<16x16xf32>
    %91 = tpu.matmul %89, %90, %cst_25 {dimension_numbers = #tpu.dot_dimension_numbers<[1], [0], [0], [1], [0, 0, 1, 1], [], []>} : vector<16x16xbf16>, vector<16x16xbf16>, vector<16x16xf32> -> vector<16x16xf32>
    %92 = arith.truncf %91 : vector<16x16xf32> to vector<16x16xbf16>
    %93 = vector.extract_strided_slice %37 {offsets = [0, 16], sizes = [32, 16], strides = [1, 1]} : vector<32x64xf32> to vector<32x16xf32>
    %94 = arith.truncf %93 : vector<32x16xf32> to vector<32x16xbf16>
    %cst_26 = arith.constant dense<0.000000e+00> : vector<16x32xf32>
    %95 = tpu.matmul %92, %94, %cst_26 {dimension_numbers = #tpu.dot_dimension_numbers<[1], [1], [0], [0], [0, 0, 1, 0], [], []>} : vector<16x16xbf16>, vector<32x16xbf16>, vector<16x32xf32> -> vector<16x32xf32>
    %96 = vector.extract_strided_slice %34 {offsets = [0, 32], sizes = [16, 16], strides = [1, 1]} : vector<16x64xf32> to vector<16x16xf32>
    %97 = vector.extract_strided_slice %35 {offsets = [0, 32], sizes = [16, 16], strides = [1, 1]} : vector<16x64xf32> to vector<16x16xf32>
    %98 = vector.extract_strided_slice %36 {offsets = [0, 32], sizes = [16, 16], strides = [1, 1]} : vector<16x64xf32> to vector<16x16xf32>
    %99 = arith.truncf %96 : vector<16x16xf32> to vector<16x16xbf16>
    %100 = arith.truncf %97 : vector<16x16xf32> to vector<16x16xbf16>
    %cst_27 = arith.constant dense<0.000000e+00> : vector<16x16xf32>
    %101 = tpu.matmul %99, %100, %cst_27 {dimension_numbers = #tpu.dot_dimension_numbers<[1], [1], [0], [0], [0, 0, 1, 0], [], []>} : vector<16x16xbf16>, vector<16x16xbf16>, vector<16x16xf32> -> vector<16x16xf32>
    %102 = arith.addf %101, %47 : vector<16x16xf32>
    %cst_28 = arith.constant dense<0xFF800000> : vector<16xf32>
    %103 = vector.multi_reduction <maximumf>, %102, %cst_28 [1] : vector<16x16xf32> to vector<16xf32>
    %104 = vector.shape_cast %103 : vector<16xf32> to vector<16x1xf32>
    %105 = vector.broadcast %104 : vector<16x1xf32> to vector<16x16xf32>
    %106 = arith.subf %102, %105 : vector<16x16xf32>
    %107 = math.exp %106 : vector<16x16xf32>
    %cst_29 = arith.constant dense<0.000000e+00> : vector<16xf32>
    %108 = vector.multi_reduction <add>, %107, %cst_29 [1] : vector<16x16xf32> to vector<16xf32>
    %109 = vector.shape_cast %108 : vector<16xf32> to vector<16x1xf32>
    %110 = tpu.reciprocal %109 {approx = true} : vector<16x1xf32> -> vector<16x1xf32>
    %111 = vector.broadcast %110 : vector<16x1xf32> to vector<16x16xf32>
    %112 = arith.mulf %107, %111 : vector<16x16xf32>
    %113 = arith.truncf %112 : vector<16x16xf32> to vector<16x16xbf16>
    %114 = arith.truncf %98 : vector<16x16xf32> to vector<16x16xbf16>
    %cst_30 = arith.constant dense<0.000000e+00> : vector<16x16xf32>
    %115 = tpu.matmul %113, %114, %cst_30 {dimension_numbers = #tpu.dot_dimension_numbers<[1], [0], [0], [1], [0, 0, 1, 1], [], []>} : vector<16x16xbf16>, vector<16x16xbf16>, vector<16x16xf32> -> vector<16x16xf32>
    %116 = arith.truncf %115 : vector<16x16xf32> to vector<16x16xbf16>
    %117 = vector.extract_strided_slice %37 {offsets = [0, 32], sizes = [32, 16], strides = [1, 1]} : vector<32x64xf32> to vector<32x16xf32>
    %118 = arith.truncf %117 : vector<32x16xf32> to vector<32x16xbf16>
    %cst_31 = arith.constant dense<0.000000e+00> : vector<16x32xf32>
    %119 = tpu.matmul %116, %118, %cst_31 {dimension_numbers = #tpu.dot_dimension_numbers<[1], [1], [0], [0], [0, 0, 1, 0], [], []>} : vector<16x16xbf16>, vector<32x16xbf16>, vector<16x32xf32> -> vector<16x32xf32>
    %120 = vector.extract_strided_slice %34 {offsets = [0, 48], sizes = [16, 16], strides = [1, 1]} : vector<16x64xf32> to vector<16x16xf32>
    %121 = vector.extract_strided_slice %35 {offsets = [0, 48], sizes = [16, 16], strides = [1, 1]} : vector<16x64xf32> to vector<16x16xf32>
    %122 = vector.extract_strided_slice %36 {offsets = [0, 48], sizes = [16, 16], strides = [1, 1]} : vector<16x64xf32> to vector<16x16xf32>
    %123 = arith.truncf %120 : vector<16x16xf32> to vector<16x16xbf16>
    %124 = arith.truncf %121 : vector<16x16xf32> to vector<16x16xbf16>
    %cst_32 = arith.constant dense<0.000000e+00> : vector<16x16xf32>
    %125 = tpu.matmul %123, %124, %cst_32 {dimension_numbers = #tpu.dot_dimension_numbers<[1], [1], [0], [0], [0, 0, 1, 0], [], []>} : vector<16x16xbf16>, vector<16x16xbf16>, vector<16x16xf32> -> vector<16x16xf32>
    %126 = arith.addf %125, %47 : vector<16x16xf32>
    %cst_33 = arith.constant dense<0xFF800000> : vector<16xf32>
    %127 = vector.multi_reduction <maximumf>, %126, %cst_33 [1] : vector<16x16xf32> to vector<16xf32>
    %128 = vector.shape_cast %127 : vector<16xf32> to vector<16x1xf32>
    %129 = vector.broadcast %128 : vector<16x1xf32> to vector<16x16xf32>
    %130 = arith.subf %126, %129 : vector<16x16xf32>
    %131 = math.exp %130 : vector<16x16xf32>
    %cst_34 = arith.constant dense<0.000000e+00> : vector<16xf32>
    %132 = vector.multi_reduction <add>, %131, %cst_34 [1] : vector<16x16xf32> to vector<16xf32>
    %133 = vector.shape_cast %132 : vector<16xf32> to vector<16x1xf32>
    %134 = tpu.reciprocal %133 {approx = true} : vector<16x1xf32> -> vector<16x1xf32>
    %135 = vector.broadcast %134 : vector<16x1xf32> to vector<16x16xf32>
    %136 = arith.mulf %131, %135 : vector<16x16xf32>
    %137 = arith.truncf %136 : vector<16x16xf32> to vector<16x16xbf16>
    %138 = arith.truncf %122 : vector<16x16xf32> to vector<16x16xbf16>
    %cst_35 = arith.constant dense<0.000000e+00> : vector<16x16xf32>
    %139 = tpu.matmul %137, %138, %cst_35 {dimension_numbers = #tpu.dot_dimension_numbers<[1], [0], [0], [1], [0, 0, 1, 1], [], []>} : vector<16x16xbf16>, vector<16x16xbf16>, vector<16x16xf32> -> vector<16x16xf32>
    %140 = arith.truncf %139 : vector<16x16xf32> to vector<16x16xbf16>
    %141 = vector.extract_strided_slice %37 {offsets = [0, 48], sizes = [32, 16], strides = [1, 1]} : vector<32x64xf32> to vector<32x16xf32>
    %142 = arith.truncf %141 : vector<32x16xf32> to vector<32x16xbf16>
    %cst_36 = arith.constant dense<0.000000e+00> : vector<16x32xf32>
    %143 = tpu.matmul %140, %142, %cst_36 {dimension_numbers = #tpu.dot_dimension_numbers<[1], [1], [0], [0], [0, 0, 1, 0], [], []>} : vector<16x16xbf16>, vector<32x16xbf16>, vector<16x32xf32> -> vector<16x32xf32>
    %144 = arith.addf %71, %95 : vector<16x32xf32>
    %145 = arith.addf %119, %143 : vector<16x32xf32>
    %146 = arith.addf %144, %145 : vector<16x32xf32>
    %c3 = arith.constant 3 : index
    %c0_37 = arith.constant 0 : index
    %147 = vector.load %arg2[%c3, %c0_37] : memref<4x192xf32, #tpu.memory_space<vmem>>, vector<1x32xf32>
    %148 = vector.broadcast %147 : vector<1x32xf32> to vector<16x32xf32>
    %149 = arith.addf %146, %148 : vector<16x32xf32>
    %c0_38 = arith.constant 0 : index
    %c0_39 = arith.constant 0 : index
    %150 = vector.load %arg3[%c0_38, %c0_39] : memref<16x32xf32, #tpu.memory_space<vmem>>, vector<16x32xf32>
    tpu.vector_store %arg3[%c0_38, %c0_39], %149 {strides = array<i32>} : memref<16x32xf32, #tpu.memory_space<vmem>>, vector<16x32xf32>,
    return
  }
}

</mosaic_0001>

<llo_original>
// kernel: mha_pallas.1
$region0: #{mha_pallas.1}
  #allocation0 [shape = 'u32[]', space=smem, size = 0x4, offset = 0x4, fixed_abs, tag = 'smem constant byte address 0x4 - core index']
  #allocation1 [shape = 'u32[144,128]{1,0:T(1,128)}', space=vmem, size = 0x12000, scoped, tag = 'internal scratch']
  %s0 = inlined_call_operand.hbm [shape: f32[16,32], index: 0, kind: input, shape index: {}]
  %s1 = inlined_call_operand.hbm [shape: f32[32,256], index: 1, kind: input, shape index: {}]
  %s2 = inlined_call_operand.vmem [shape: f32[4,192], index: 2, kind: input, shape index: {}]
  %s3 = inlined_call_operand.hbm [shape: f32[16,32], index: 3, kind: output, shape index: {}]
  %s4 = sld [smem:[#allocation0]]
  $region30: #{mha_pallas.1} parent=0
    _
  %s6 = ssub.s32 1, %s4
  %s7 = scalar_select 0, %s6, %s4
  $region1: #{mha_pallas.1} parent=0
    #allocation2 [shape = 'u8[8192]{0}', space=vmem, size = 0x2000, scoped, tag = 'input window, operand 0, single buffered']
    #allocation3 [shape = 's32[1]{0}', space=sflag, size = 0x4, scoped, tag = 'scoped memory for mha_pallas.1']
    #allocation4 [shape = 's32[1]{0}', space=sflag, size = 0x4, scoped, tag = 'scoped memory for mha_pallas.1']
    #allocation5 [shape = 'u8[32768]{0}', space=vmem, size = 0x8000, scoped, tag = 'input window, operand 1, single buffered']
    #allocation6 [shape = 's32[1]{0}', space=sflag, size = 0x4, scoped, tag = 'scoped memory for mha_pallas.1']
    #allocation7 [shape = 'u8[8192]{0}', space=vmem, size = 0x2000, scoped, tag = 'output window, operand 0, single buffered']
    %8 = vsyncpa [#allocation3], 0
    %9 = vsyncpa [#allocation6], 0
    %10 = vsyncpa [#allocation4], 0
    // Predicated region
    $region2: #{mha_pallas.1} parent=1 // pred_check
      _
    $region3: #{mha_pallas.1} parent=1 // pred_check_branch
      %12 = sbr.rel (0) target = $region5
    $region4: #{mha_pallas.1} parent=1 // pred_region
      %s14 = ssub.s32 256, 256
      %15 = vsyncadd [#allocation3], %s14
      %s16 = sshll.u32 [#allocation2], 4
      %s17 = int_to_ptr.vmem [resolvable:$true] %s16
      %22 = dma.hbm_to_vmem [thread:$0]  %s0, 256, %s17, [#allocation3], 128, 128, 8
    $region5: #{mha_pallas.1} parent=1 // pred_fallthru
      _
    // Predicated region
    $region6: #{mha_pallas.1} parent=1 // pred_check
      _
    $region7: #{mha_pallas.1} parent=1 // pred_check_branch
      %24 = sbr.rel (0) target = $region9
    $region8: #{mha_pallas.1} parent=1 // pred_region
      %s26 = ssub.s32 1024, 1024
      %27 = vsyncadd [#allocation6], %s26
      %s28 = sshll.u32 [#allocation5], 4
      %s29 = int_to_ptr.vmem [resolvable:$true] %s28
      %34 = dma.hbm_to_vmem [thread:$0]  %s1, 1024, %s29, [#allocation6], 256, 256, 16
    $region9: #{mha_pallas.1} parent=1 // pred_fallthru
      _
    // Predicated region
    $region10: #{mha_pallas.1} parent=1 // pred_check
      _
    $region11: #{mha_pallas.1} parent=1 // pred_check_branch
      %36 = sbr.rel (0) target = $region13
    $region12: #{mha_pallas.1} parent=1 // pred_region
      _
    $region13: #{mha_pallas.1} parent=1 // pred_fallthru
      _
    // Predicated region
    $region14: #{mha_pallas.1} parent=1 // pred_check
      _
    $region15: #{mha_pallas.1} parent=1 // pred_check_branch
      %38 = sbr.rel (0) target = $region17
    $region16: #{mha_pallas.1} parent=1 // pred_region
      %39 = dma.done [#allocation3], 256
    $region17: #{mha_pallas.1} parent=1 // pred_fallthru
      _
    // Predicated region
    $region18: #{mha_pallas.1} parent=1 // pred_check
      _
    $region19: #{mha_pallas.1} parent=1 // pred_check_branch
      %41 = sbr.rel (0) target = $region21
    $region20: #{mha_pallas.1} parent=1 // pred_region
      %42 = dma.done [#allocation6], 1024
    $region21: #{mha_pallas.1} parent=1 // pred_fallthru
      _
    %v44 = vld [vmem:[#allocation2] sm:$0xff]
    %v45 = vld [vmem:[#allocation2 + $0x8] sm:$0xff]
    %v46 = vld [vmem:[%s2] sm:$0x1]
    %v47 = vld [vmem:[%s2 + $0x1] sm:$0x1]
    %vm48 = vcmask 261120
    %v49 = vsel %vm48, %v44, 0.0
    %50 = vadd.xlane.f32.xlu0 %v49
    %v51 = vpop.xlane.xlu0 %50
    %v52 = vsel %vm48, %v45, 0.0
    %53 = vadd.xlane.f32.xlu0 %v52
    %v54 = vpop.xlane.xlu0 %53
    %v55 = vrcp.pop 32.0
    %v56 = vmul.f32 %v51, %v55
    %v57 = vmul.f32 %v54, %v55
    %v58 = vsub.f32 %v44, %v56
    %v59 = vsub.f32 %v45, %v57
    %v60 = vmul.f32 %v58, %v58
    %v61 = vmul.f32 %v59, %v59
    %v62 = vsel %vm48, %v60, 0.0
    %63 = vadd.xlane.f32.xlu0 %v62
    %v64 = vpop.xlane.xlu0 %63
    %v65 = vsel %vm48, %v61, 0.0
    %66 = vadd.xlane.f32.xlu0 %v65
    %v67 = vpop.xlane.xlu0 %66
    %v68 = vmul.f32 %v64, %v55
    %v69 = vmul.f32 %v67, %v55
    %v70 = vadd.f32 %v68, 1e-05
    %v71 = vadd.f32 %v69, 1e-05
    %v72 = vrsqrt.pop %v70
    %v73 = vrsqrt.pop %v71
    %v74 = vmul.f32 %v58, %v72
    %v75 = vmul.f32 %v59, %v73
    %v76 = vlaneseq
    %v77 = vshrl.u32 %v76, 7
    %v78 = vsub.s32 0, %v77
    %v79 = vrot.slane %v46, %v78
    %v80 = vmul.f32 %v74, %v79
    %v81 = vmul.f32 %v75, %v79
    %v82 = vlaneseq
    %v83 = vshrl.u32 %v82, 7
    %v84 = vsub.s32 0, %v83
    %v85 = vrot.slane %v47, %v84
    %v86 = vadd.f32 %v80, %v85
    %v87 = vadd.f32 %v81, %v85
    %v88 = vld [vmem:[#allocation5] sm:$0xff]
    %v89 = vld [vmem:[#allocation5 + $0x8] sm:$0xff]
    %v90 = vld [vmem:[#allocation5 + $0x10] sm:$0xff]
    %v91 = vld [vmem:[#allocation5 + $0x18] sm:$0xff]
    %v92 = vld [vmem:[#allocation5 + $0x20] sm:$0xff]
    %v93 = vld [vmem:[#allocation5 + $0x28] sm:$0xff]
    %v94 = vld [vmem:[#allocation5 + $0x30] sm:$0xff]
    %v95 = vld [vmem:[#allocation5 + $0x38] sm:$0xff]
    %s96 = scalar_lea.vmem %s2, 2
    %v97 = vld [vmem:[%s96] ss:$4 sm:$0x3]
    %v98 = vpack.c.bf16 %v87, %v86
    %v99 = vpack.c.bf16 %v90, %v88
    %v100 = vpack.c.bf16 %v91, %v89
    %v101 = vpack.c.bf16 %v94, %v92
    %v102 = vpack.c.bf16 %v95, %v93
    %v104 = vlaneseq
    %v105 = vshrl.u32 %v104, 7
    %v106 = vsub.s32 0, %v105
    %v107 = vrot.slane %v97, %v106
    %v108 = vlaneseq
    %v109 = vshrl.u32 %v108, 7
    %v110 = vsub.s32 1, %v109
    %v111 = vrot.slane %v97, %v110
    %v115 = vsel %vm48, %v98, 0
    %117 = vmatprep.subr.bf16.mxu0 %v100
    %118 = vmatpush1.bf16.msra.mxu0 %v99
    %119 = vmatprep.subr.bf16.mxu0 %v102
    %120 = vmatpush1.bf16.msra.mxu0 %v101
    %121 = vmatprep.subr.bf16.mxu0 0
    %122 = vmatpush1.bf16.msra.mxu0 0
    %123 = vmatprep.subr.bf16.mxu0 0
    %124 = vmatpush1.bf16.msra.mxu0 0
    %125 = vmatprep.subr.bf16.mxu0 0
    %126 = vmatpush1.bf16.msra.mxu0 0
    %127 = vmatprep.subr.bf16.mxu0 0
    %128 = vmatpush1.bf16.msra.mxu0 0
    %129 = vmatprep.subr.bf16.mxu0 0
    %130 = vmatpush1.bf16.msra.mxu0 0
    %131 = vmatprep.subr.bf16.mxu0 0
    %132 = vmatpush1.bf16.msra.mxu0 0
    %133 = vmatprep.subr.bf16.mxu0 0
    %134 = vmatpush1.bf16.msra.mxu0 0
    %135 = vmatprep.subr.bf16.mxu0 0
    %136 = vmatpush1.bf16.msra.mxu0 0
    %137 = vmatprep.subr.bf16.mxu0 0
    %138 = vmatpush1.bf16.msra.mxu0 0
    %139 = vmatprep.subr.bf16.mxu0 0
    %140 = vmatpush1.bf16.msra.mxu0 0
    %141 = vmatprep.subr.bf16.mxu0 0
    %142 = vmatpush1.bf16.msra.mxu0 0
    %143 = vmatprep.subr.bf16.mxu0 0
    %144 = vmatpush1.bf16.msra.mxu0 0
    %145 = vmatprep.subr.bf16.mxu0 0
    %146 = vmatpush1.bf16.msra.mxu0 0
    %147 = vmatprep.subr.bf16.mxu0 0
    %148 = vmatpush1.bf16.msra.mxu0 0
    %149 = vmatprep.mubr.bf16.mxu0 0
    %150 = vmatmul.mubr.bf16.gmra.mrb[0].mxu0 %v115
    %v151 = vpop.f32.mrb[0].mxu0
    %v152 = vadd.f32 %v107, %v151
    %v153 = vpop.f32.mrb[0].mxu0
    %v154 = vadd.f32 %v111, %v153
    %v155 = vpop.f32.mrb[0].mxu0
    %v156 = vadd.f32 %v107, %v155
    %v157 = vpop.f32.mrb[0].mxu0
    %v158 = vadd.f32 %v111, %v157
    %159 = vdwg.mxu0
    %v160 = vmul.f32 %v152, 0.25
    %v161 = vmul.f32 %v156, 0.25
    %v162 = vlaneseq
    %v163 = vshrl.u32 %v162, 7
    %v164 = vadd.s32 %v163, 8
    %v165 = vlaneseq
    %v166 = vand.u32 %v165, 127
    %v167 = vshra.s32 %v163, 3
    %v168 = vshra.s32 %v164, 3
    %v169 = vshra.s32 %v166, 3
    %vm170 = vcmp.eq.s32.totalorder %v167, %v169
    %vm171 = vcmp.eq.s32.totalorder %v168, %v169
    %v172 = vsel %vm170, 0.0, -1e+09
    %v173 = vsel %vm171, 0.0, -1e+09
    %v174 = vpack.c.bf16 %v161, %v160
    %v175 = vpack.c.bf16 %v156, %v152
    %177 = vrot.lane.b32.xlu0 %v175, 64
    %v178 = vpop.permute.xlu0 %177
    %vm179 = vcmask 130048
    %v181 = vsel %vm179, %v174, 0
    %v184 = vsel %vm179, %v178, 0
    %186 = vmatprep.subr.bf16.mxu0 0
    %187 = vmatpush1.bf16.xpose.msra.mxu0 %v184
    %188 = vmatprep.subr.bf16.mxu0 0
    %189 = vmatpush1.bf16.xpose.msra.mxu0 0
    %190 = vmatprep.subr.bf16.mxu0 0
    %191 = vmatpush1.bf16.xpose.msra.mxu0 0
    %192 = vmatprep.subr.bf16.mxu0 0
    %193 = vmatpush1.bf16.xpose.msra.mxu0 0
    %194 = vmatprep.subr.bf16.mxu0 0
    %195 = vmatpush1.bf16.xpose.msra.mxu0 0
    %196 = vmatprep.subr.bf16.mxu0 0
    %197 = vmatpush1.bf16.xpose.msra.mxu0 0
    %198 = vmatprep.subr.bf16.mxu0 0
    %199 = vmatpush1.bf16.xpose.msra.mxu0 0
    %200 = vmatprep.subr.bf16.mxu0 0
    %201 = vmatpush1.bf16.xpose.msra.mxu0 0
    %202 = vmatprep.subr.bf16.mxu0 0
    %203 = vmatpush1.bf16.xpose.msra.mxu0 0
    %204 = vmatprep.subr.bf16.mxu0 0
    %205 = vmatpush1.bf16.xpose.msra.mxu0 0
    %206 = vmatprep.subr.bf16.mxu0 0
    %207 = vmatpush1.bf16.xpose.msra.mxu0 0
    %208 = vmatprep.subr.bf16.mxu0 0
    %209 = vmatpush1.bf16.xpose.msra.mxu0 0
    %210 = vmatprep.subr.bf16.mxu0 0
    %211 = vmatpush1.bf16.xpose.msra.mxu0 0
    %212 = vmatprep.subr.bf16.mxu0 0
    %213 = vmatpush1.bf16.xpose.msra.mxu0 0
    %214 = vmatprep.subr.bf16.mxu0 0
    %215 = vmatpush1.bf16.xpose.msra.mxu0 0
    %216 = vmatprep.subr.bf16.mxu0 0
    %217 = vmatpush1.bf16.xpose.msra.mxu0 0
    %218 = vmatprep.mubr.bf16.mxu0 0
    %219 = vmatmul.mubr.bf16.gmra.mrb[0].mxu0 %v181
    %v220 = vpop.f32.mrb[0].mxu0
    %v221 = vadd.f32 %v172, %v220
    %v222 = vpop.f32.mrb[0].mxu0
    %v223 = vpop.f32.mrb[0].mxu0
    %v224 = vadd.f32 %v173, %v223
    %v225 = vpop.f32.mrb[0].mxu0
    %226 = vdwg.mxu0
    %v227 = vsel %vm179, %v221, -inf
    %228 = vmax.xlane.f32.xlu0 %v227
    %v229 = vpop.xlane.xlu0 %228
    %v230 = vsel %vm179, %v224, -inf
    %231 = vmax.xlane.f32.xlu0 %v230
    %v232 = vpop.xlane.xlu0 %231
    %v233 = vsub.f32 %v221, %v229
    %v234 = vsub.f32 %v224, %v232
    %v235 = vmul.f32 %v233, 1.442695
    %v236 = vpow.pop %v235
    %v237 = vmul.f32 %v234, 1.442695
    %v238 = vpow.pop %v237
    %v239 = vsel %vm179, %v236, 0.0
    %240 = vadd.xlane.f32.xlu0 %v239
    %v241 = vpop.xlane.xlu0 %240
    %v242 = vsel %vm179, %v238, 0.0
    %243 = vadd.xlane.f32.xlu0 %v242
    %v244 = vpop.xlane.xlu0 %243
    %v245 = vrcp.pop %v241
    %v246 = vrcp.pop %v244
    %v247 = vmul.f32 %v236, %v245
    %v248 = vmul.f32 %v238, %v246
    %v249 = vpack.c.bf16 %v248, %v247
    %v250 = vpack.c.bf16 %v158, %v154
    %v252 = vsel %vm179, %v249, 0
    %254 = vmatprep.subr.bf16.mxu0 0
    %255 = vmatpush1.bf16.msra.mxu0 %v250
    %256 = vmatprep.subr.bf16.mxu0 0
    %257 = vmatpush1.bf16.msra.mxu0 0
    %258 = vmatprep.subr.bf16.mxu0 0
    %259 = vmatpush1.bf16.msra.mxu0 0
    %260 = vmatprep.subr.bf16.mxu0 0
    %261 = vmatpush1.bf16.msra.mxu0 0
    %262 = vmatprep.subr.bf16.mxu0 0
    %263 = vmatpush1.bf16.msra.mxu0 0
    %264 = vmatprep.subr.bf16.mxu0 0
    %265 = vmatpush1.bf16.msra.mxu0 0
    %266 = vmatprep.subr.bf16.mxu0 0
    %267 = vmatpush1.bf16.msra.mxu0 0
    %268 = vmatprep.subr.bf16.mxu0 0
    %269 = vmatpush1.bf16.msra.mxu0 0
    %270 = vmatprep.subr.bf16.mxu0 0
    %271 = vmatpush1.bf16.msra.mxu0 0
    %272 = vmatprep.subr.bf16.mxu0 0
    %273 = vmatpush1.bf16.msra.mxu0 0
    %274 = vmatprep.subr.bf16.mxu0 0
    %275 = vmatpush1.bf16.msra.mxu0 0
    %276 = vmatprep.subr.bf16.mxu0 0
    %277 = vmatpush1.bf16.msra.mxu0 0
    %278 = vmatprep.subr.bf16.mxu0 0
    %279 = vmatpush1.bf16.msra.mxu0 0
    %280 = vmatprep.subr.bf16.mxu0 0
    %281 = vmatpush1.bf16.msra.mxu0 0
    %282 = vmatprep.subr.bf16.mxu0 0
    %283 = vmatpush1.bf16.msra.mxu0 0
    %284 = vmatprep.subr.bf16.mxu0 0
    %285 = vmatpush1.bf16.msra.mxu0 0
    %286 = vmatprep.mubr.bf16.mxu0 0
    %287 = vmatmul.mubr.bf16.gmra.mrb[0].mxu0 %v252
    %v288 = vpop.f32.mrb[0].mxu0
    %v289 = vadd.f32 0.0, %v288
    %v290 = vpop.f32.mrb[0].mxu0
    %v291 = vpop.f32.mrb[0].mxu0
    %v292 = vadd.f32 0.0, %v291
    %v293 = vpop.f32.mrb[0].mxu0
    %294 = vdwg.mxu0
    %v295 = vpack.c.bf16 %v292, %v289
    %297 = vrot.lane.b32.xlu0 %v174, 112
    %v298 = vpop.permute.xlu0 %297
    %299 = vrot.lane.b32.xlu0 %v175, 48
    %v300 = vpop.permute.xlu0 %299
    %v302 = vsel %vm179, %v298, 0
    %v305 = vsel %vm179, %v300, 0
    %307 = vmatprep.subr.bf16.mxu0 0
    %308 = vmatpush1.bf16.xpose.msra.mxu0 %v305
    %309 = vmatprep.subr.bf16.mxu0 0
    %310 = vmatpush1.bf16.xpose.msra.mxu0 0
    %311 = vmatprep.subr.bf16.mxu0 0
    %312 = vmatpush1.bf16.xpose.msra.mxu0 0
    %313 = vmatprep.subr.bf16.mxu0 0
    %314 = vmatpush1.bf16.xpose.msra.mxu0 0
    %315 = vmatprep.subr.bf16.mxu0 0
    %316 = vmatpush1.bf16.xpose.msra.mxu0 0
    %317 = vmatprep.subr.bf16.mxu0 0
    %318 = vmatpush1.bf16.xpose.msra.mxu0 0
    %319 = vmatprep.subr.bf16.mxu0 0
    %320 = vmatpush1.bf16.xpose.msra.mxu0 0
    %321 = vmatprep.subr.bf16.mxu0 0
    %322 = vmatpush1.bf16.xpose.msra.mxu0 0
    %323 = vmatprep.subr.bf16.mxu0 0
    %324 = vmatpush1.bf16.xpose.msra.mxu0 0
    %325 = vmatprep.subr.bf16.mxu0 0
    %326 = vmatpush1.bf16.xpose.msra.mxu0 0
    %327 = vmatprep.subr.bf16.mxu0 0
    %328 = vmatpush1.bf16.xpose.msra.mxu0 0
    %329 = vmatprep.subr.bf16.mxu0 0
    %330 = vmatpush1.bf16.xpose.msra.mxu0 0
    %331 = vmatprep.subr.bf16.mxu0 0
    %332 = vmatpush1.bf16.xpose.msra.mxu0 0
    %333 = vmatprep.subr.bf16.mxu0 0
    %334 = vmatpush1.bf16.xpose.msra.mxu0 0
    %335 = vmatprep.subr.bf16.mxu0 0
    %336 = vmatpush1.bf16.xpose.msra.mxu0 0
    %337 = vmatprep.subr.bf16.mxu0 0
    %338 = vmatpush1.bf16.xpose.msra.mxu0 0
    %339 = vmatprep.mubr.bf16.mxu0 0
    %340 = vmatmul.mubr.bf16.gmra.mrb[0].mxu0 %v302
    %v341 = vpop.f32.mrb[0].mxu0
    %v342 = vadd.f32 %v172, %v341
    %v343 = vpop.f32.mrb[0].mxu0
    %v344 = vpop.f32.mrb[0].mxu0
    %v345 = vadd.f32 %v173, %v344
    %v346 = vpop.f32.mrb[0].mxu0
    %347 = vdwg.mxu0
    %v348 = vsel %vm179, %v342, -inf
    %349 = vmax.xlane.f32.xlu0 %v348
    %v350 = vpop.xlane.xlu0 %349
    %v351 = vsel %vm179, %v345, -inf
    %352 = vmax.xlane.f32.xlu0 %v351
    %v353 = vpop.xlane.xlu0 %352
    %v354 = vsub.f32 %v342, %v350
    %v355 = vsub.f32 %v345, %v353
    %v356 = vmul.f32 %v354, 1.442695
    %v357 = vpow.pop %v356
    %v358 = vmul.f32 %v355, 1.442695
    %v359 = vpow.pop %v358
    %v360 = vsel %vm179, %v357, 0.0
    %361 = vadd.xlane.f32.xlu0 %v360
    %v362 = vpop.xlane.xlu0 %361
    %v363 = vsel %vm179, %v359, 0.0
    %364 = vadd.xlane.f32.xlu0 %v363
    %v365 = vpop.xlane.xlu0 %364
    %v366 = vrcp.pop %v362
    %v367 = vrcp.pop %v365
    %v368 = vmul.f32 %v357, %v366
    %v369 = vmul.f32 %v359, %v367
    %v370 = vpack.c.bf16 %v369, %v368
    %372 = vrot.lane.b32.xlu0 %v250, 112
    %v373 = vpop.permute.xlu0 %372
    %v376 = vsel %vm179, %v370, 0
    %378 = vmatprep.subr.bf16.mxu0 0
    %379 = vmatpush1.bf16.msra.mxu0 %v373
    %380 = vmatprep.subr.bf16.mxu0 0
    %381 = vmatpush1.bf16.msra.mxu0 0
    %382 = vmatprep.subr.bf16.mxu0 0
    %383 = vmatpush1.bf16.msra.mxu0 0
    %384 = vmatprep.subr.bf16.mxu0 0
    %385 = vmatpush1.bf16.msra.mxu0 0
    %386 = vmatprep.subr.bf16.mxu0 0
    %387 = vmatpush1.bf16.msra.mxu0 0
    %388 = vmatprep.subr.bf16.mxu0 0
    %389 = vmatpush1.bf16.msra.mxu0 0
    %390 = vmatprep.subr.bf16.mxu0 0
    %391 = vmatpush1.bf16.msra.mxu0 0
    %392 = vmatprep.subr.bf16.mxu0 0
    %393 = vmatpush1.bf16.msra.mxu0 0
    %394 = vmatprep.subr.bf16.mxu0 0
    %395 = vmatpush1.bf16.msra.mxu0 0
    %396 = vmatprep.subr.bf16.mxu0 0
    %397 = vmatpush1.bf16.msra.mxu0 0
    %398 = vmatprep.subr.bf16.mxu0 0
    %399 = vmatpush1.bf16.msra.mxu0 0
    %400 = vmatprep.subr.bf16.mxu0 0
    %401 = vmatpush1.bf16.msra.mxu0 0
    %402 = vmatprep.subr.bf16.mxu0 0
    %403 = vmatpush1.bf16.msra.mxu0 0
    %404 = vmatprep.subr.bf16.mxu0 0
    %405 = vmatpush1.bf16.msra.mxu0 0
    %406 = vmatprep.subr.bf16.mxu0 0
    %407 = vmatpush1.bf16.msra.mxu0 0
    %408 = vmatprep.subr.bf16.mxu0 0
    %409 = vmatpush1.bf16.msra.mxu0 0
    %410 = vmatprep.mubr.bf16.mxu0 0
    %411 = vmatmul.mubr.bf16.gmra.mrb[0].mxu0 %v376
    %v412 = vpop.f32.mrb[0].mxu0
    %v413 = vadd.f32 0.0, %v412
    %v414 = vpop.f32.mrb[0].mxu0
    %v415 = vpop.f32.mrb[0].mxu0
    %v416 = vadd.f32 0.0, %v415
    %v417 = vpop.f32.mrb[0].mxu0
    %418 = vdwg.mxu0
    %v419 = vpack.c.bf16 %v416, %v413
    %422 = vrot.lane.b32.xlu0 %v100, 48
    %v423 = vpop.permute.xlu0 %422
    %424 = vrot.lane.b32.xlu0 %v102, 48
    %v425 = vpop.permute.xlu0 %424
    %v427 = vsel %vm179, %v419, 0
    %v430 = vsel %vm179, %v423, 0
    %v433 = vsel %vm179, %v425, 0
    %435 = vmatprep.subr.bf16.mxu0 0
    %436 = vmatpush1.bf16.xpose.msra.mxu0 %v430
    %437 = vmatprep.subr.bf16.mxu0 0
    %438 = vmatpush1.bf16.xpose.msra.mxu0 %v433
    %439 = vmatprep.subr.bf16.mxu0 0
    %440 = vmatpush1.bf16.xpose.msra.mxu0 0
    %441 = vmatprep.subr.bf16.mxu0 0
    %442 = vmatpush1.bf16.xpose.msra.mxu0 0
    %443 = vmatprep.subr.bf16.mxu0 0
    %444 = vmatpush1.bf16.xpose.msra.mxu0 0
    %445 = vmatprep.subr.bf16.mxu0 0
    %446 = vmatpush1.bf16.xpose.msra.mxu0 0
    %447 = vmatprep.subr.bf16.mxu0 0
    %448 = vmatpush1.bf16.xpose.msra.mxu0 0
    %449 = vmatprep.subr.bf16.mxu0 0
    %450 = vmatpush1.bf16.xpose.msra.mxu0 0
    %451 = vmatprep.subr.bf16.mxu0 0
    %452 = vmatpush1.bf16.xpose.msra.mxu0 0
    %453 = vmatprep.subr.bf16.mxu0 0
    %454 = vmatpush1.bf16.xpose.msra.mxu0 0
    %455 = vmatprep.subr.bf16.mxu0 0
    %456 = vmatpush1.bf16.xpose.msra.mxu0 0
    %457 = vmatprep.subr.bf16.mxu0 0
    %458 = vmatpush1.bf16.xpose.msra.mxu0 0
    %459 = vmatprep.subr.bf16.mxu0 0
    %460 = vmatpush1.bf16.xpose.msra.mxu0 0
    %461 = vmatprep.subr.bf16.mxu0 0
    %462 = vmatpush1.bf16.xpose.msra.mxu0 0
    %463 = vmatprep.subr.bf16.mxu0 0
    %464 = vmatpush1.bf16.xpose.msra.mxu0 0
    %465 = vmatprep.subr.bf16.mxu0 0
    %466 = vmatpush1.bf16.xpose.msra.mxu0 0
    %467 = vmatprep.mubr.bf16.mxu0 0
    %468 = vmatmul.mubr.bf16.gmra.mrb[0].mxu0 %v427
    %v469 = vpop.f32.mrb[0].mxu0
    %v470 = vadd.f32 0.0, %v469
    %v471 = vpop.f32.mrb[0].mxu0
    %v472 = vpop.f32.mrb[0].mxu0
    %v473 = vadd.f32 0.0, %v472
    %v474 = vpop.f32.mrb[0].mxu0
    %475 = vdwg.mxu0
    %476 = vrot.lane.b32.xlu0 %v174, 96
    %v477 = vpop.permute.xlu0 %476
    %478 = vrot.lane.b32.xlu0 %v175, 32
    %v479 = vpop.permute.xlu0 %478
    %v481 = vsel %vm179, %v477, 0
    %v484 = vsel %vm179, %v479, 0
    %486 = vmatprep.subr.bf16.mxu0 0
    %487 = vmatpush1.bf16.xpose.msra.mxu0 %v484
    %488 = vmatprep.subr.bf16.mxu0 0
    %489 = vmatpush1.bf16.xpose.msra.mxu0 0
    %490 = vmatprep.subr.bf16.mxu0 0
    %491 = vmatpush1.bf16.xpose.msra.mxu0 0
    %492 = vmatprep.subr.bf16.mxu0 0
    %493 = vmatpush1.bf16.xpose.msra.mxu0 0
    %494 = vmatprep.subr.bf16.mxu0 0
    %495 = vmatpush1.bf16.xpose.msra.mxu0 0
    %496 = vmatprep.subr.bf16.mxu0 0
    %497 = vmatpush1.bf16.xpose.msra.mxu0 0
    %498 = vmatprep.subr.bf16.mxu0 0
    %499 = vmatpush1.bf16.xpose.msra.mxu0 0
    %500 = vmatprep.subr.bf16.mxu0 0
    %501 = vmatpush1.bf16.xpose.msra.mxu0 0
    %502 = vmatprep.subr.bf16.mxu0 0
    %503 = vmatpush1.bf16.xpose.msra.mxu0 0
    %504 = vmatprep.subr.bf16.mxu0 0
    %505 = vmatpush1.bf16.xpose.msra.mxu0 0
    %506 = vmatprep.subr.bf16.mxu0 0
    %507 = vmatpush1.bf16.xpose.msra.mxu0 0
    %508 = vmatprep.subr.bf16.mxu0 0
    %509 = vmatpush1.bf16.xpose.msra.mxu0 0
    %510 = vmatprep.subr.bf16.mxu0 0
    %511 = vmatpush1.bf16.xpose.msra.mxu0 0
    %512 = vmatprep.subr.bf16.mxu0 0
    %513 = vmatpush1.bf16.xpose.msra.mxu0 0
    %514 = vmatprep.subr.bf16.mxu0 0
    %515 = vmatpush1.bf16.xpose.msra.mxu0 0
    %516 = vmatprep.subr.bf16.mxu0 0
    %517 = vmatpush1.bf16.xpose.msra.mxu0 0
    %518 = vmatprep.mubr.bf16.mxu0 0
    %519 = vmatmul.mubr.bf16.gmra.mrb[0].mxu0 %v481
    %v520 = vpop.f32.mrb[0].mxu0
    %v521 = vadd.f32 %v172, %v520
    %v522 = vpop.f32.mrb[0].mxu0
    %v523 = vpop.f32.mrb[0].mxu0
    %v524 = vadd.f32 %v173, %v523
    %v525 = vpop.f32.mrb[0].mxu0
    %526 = vdwg.mxu0
    %v527 = vsel %vm179, %v521, -inf
    %528 = vmax.xlane.f32.xlu0 %v527
    %v529 = vpop.xlane.xlu0 %528
    %v530 = vsel %vm179, %v524, -inf
    %531 = vmax.xlane.f32.xlu0 %v530
    %v532 = vpop.xlane.xlu0 %531
    %v533 = vsub.f32 %v521, %v529
    %v534 = vsub.f32 %v524, %v532
    %v535 = vmul.f32 %v533, 1.442695
    %v536 = vpow.pop %v535
    %v537 = vmul.f32 %v534, 1.442695
    %v538 = vpow.pop %v537
    %v539 = vsel %vm179, %v536, 0.0
    %540 = vadd.xlane.f32.xlu0 %v539
    %v541 = vpop.xlane.xlu0 %540
    %v542 = vsel %vm179, %v538, 0.0
    %543 = vadd.xlane.f32.xlu0 %v542
    %v544 = vpop.xlane.xlu0 %543
    %v545 = vrcp.pop %v541
    %v546 = vrcp.pop %v544
    %v547 = vmul.f32 %v536, %v545
    %v548 = vmul.f32 %v538, %v546
    %v549 = vpack.c.bf16 %v548, %v547
    %550 = vrot.lane.b32.xlu0 %v250, 96
    %v551 = vpop.permute.xlu0 %550
    %v554 = vsel %vm179, %v549, 0
    %556 = vmatprep.subr.bf16.mxu0 0
    %557 = vmatpush1.bf16.msra.mxu0 %v551
    %558 = vmatprep.subr.bf16.mxu0 0
    %559 = vmatpush1.bf16.msra.mxu0 0
    %560 = vmatprep.subr.bf16.mxu0 0
    %561 = vmatpush1.bf16.msra.mxu0 0
    %562 = vmatprep.subr.bf16.mxu0 0
    %563 = vmatpush1.bf16.msra.mxu0 0
    %564 = vmatprep.subr.bf16.mxu0 0
    %565 = vmatpush1.bf16.msra.mxu0 0
    %566 = vmatprep.subr.bf16.mxu0 0
    %567 = vmatpush1.bf16.msra.mxu0 0
    %568 = vmatprep.subr.bf16.mxu0 0
    %569 = vmatpush1.bf16.msra.mxu0 0
    %570 = vmatprep.subr.bf16.mxu0 0
    %571 = vmatpush1.bf16.msra.mxu0 0
    %572 = vmatprep.subr.bf16.mxu0 0
    %573 = vmatpush1.bf16.msra.mxu0 0
    %574 = vmatprep.subr.bf16.mxu0 0
    %575 = vmatpush1.bf16.msra.mxu0 0
    %576 = vmatprep.subr.bf16.mxu0 0
    %577 = vmatpush1.bf16.msra.mxu0 0
    %578 = vmatprep.subr.bf16.mxu0 0
    %579 = vmatpush1.bf16.msra.mxu0 0
    %580 = vmatprep.subr.bf16.mxu0 0
    %581 = vmatpush1.bf16.msra.mxu0 0
    %582 = vmatprep.subr.bf16.mxu0 0
    %583 = vmatpush1.bf16.msra.mxu0 0
    %584 = vmatprep.subr.bf16.mxu0 0
    %585 = vmatpush1.bf16.msra.mxu0 0
    %586 = vmatprep.subr.bf16.mxu0 0
    %587 = vmatpush1.bf16.msra.mxu0 0
    %588 = vmatprep.mubr.bf16.mxu0 0
    %589 = vmatmul.mubr.bf16.gmra.mrb[0].mxu0 %v554
    %v590 = vpop.f32.mrb[0].mxu0
    %v591 = vadd.f32 0.0, %v590
    %v592 = vpop.f32.mrb[0].mxu0
    %v593 = vpop.f32.mrb[0].mxu0
    %v594 = vadd.f32 0.0, %v593
    %v595 = vpop.f32.mrb[0].mxu0
    %596 = vdwg.mxu0
    %v597 = vpack.c.bf16 %v594, %v591
    %598 = vrot.lane.b32.xlu0 %v174, 80
    %v599 = vpop.permute.xlu0 %598
    %600 = vrot.lane.b32.xlu0 %v175, 16
    %v601 = vpop.permute.xlu0 %600
    %v603 = vsel %vm179, %v599, 0
    %v606 = vsel %vm179, %v601, 0
    %608 = vmatprep.subr.bf16.mxu0 0
    %609 = vmatpush1.bf16.xpose.msra.mxu0 %v606
    %610 = vmatprep.subr.bf16.mxu0 0
    %611 = vmatpush1.bf16.xpose.msra.mxu0 0
    %612 = vmatprep.subr.bf16.mxu0 0
    %613 = vmatpush1.bf16.xpose.msra.mxu0 0
    %614 = vmatprep.subr.bf16.mxu0 0
    %615 = vmatpush1.bf16.xpose.msra.mxu0 0
    %616 = vmatprep.subr.bf16.mxu0 0
    %617 = vmatpush1.bf16.xpose.msra.mxu0 0
    %618 = vmatprep.subr.bf16.mxu0 0
    %619 = vmatpush1.bf16.xpose.msra.mxu0 0
    %620 = vmatprep.subr.bf16.mxu0 0
    %621 = vmatpush1.bf16.xpose.msra.mxu0 0
    %622 = vmatprep.subr.bf16.mxu0 0
    %623 = vmatpush1.bf16.xpose.msra.mxu0 0
    %624 = vmatprep.subr.bf16.mxu0 0
    %625 = vmatpush1.bf16.xpose.msra.mxu0 0
    %626 = vmatprep.subr.bf16.mxu0 0
    %627 = vmatpush1.bf16.xpose.msra.mxu0 0
    %628 = vmatprep.subr.bf16.mxu0 0
    %629 = vmatpush1.bf16.xpose.msra.mxu0 0
    %630 = vmatprep.subr.bf16.mxu0 0
    %631 = vmatpush1.bf16.xpose.msra.mxu0 0
    %632 = vmatprep.subr.bf16.mxu0 0
    %633 = vmatpush1.bf16.xpose.msra.mxu0 0
    %634 = vmatprep.subr.bf16.mxu0 0
    %635 = vmatpush1.bf16.xpose.msra.mxu0 0
    %636 = vmatprep.subr.bf16.mxu0 0
    %637 = vmatpush1.bf16.xpose.msra.mxu0 0
    %638 = vmatprep.subr.bf16.mxu0 0
    %639 = vmatpush1.bf16.xpose.msra.mxu0 0
    %640 = vmatprep.mubr.bf16.mxu0 0
    %641 = vmatmul.mubr.bf16.gmra.mrb[0].mxu0 %v603
    %v642 = vpop.f32.mrb[0].mxu0
    %v643 = vadd.f32 %v172, %v642
    %v644 = vpop.f32.mrb[0].mxu0
    %v645 = vpop.f32.mrb[0].mxu0
    %v646 = vadd.f32 %v173, %v645
    %v647 = vpop.f32.mrb[0].mxu0
    %648 = vdwg.mxu0
    %v649 = vsel %vm179, %v643, -inf
    %650 = vmax.xlane.f32.xlu0 %v649
    %v651 = vpop.xlane.xlu0 %650
    %v652 = vsel %vm179, %v646, -inf
    %653 = vmax.xlane.f32.xlu0 %v652
    %v654 = vpop.xlane.xlu0 %653
    %v655 = vsub.f32 %v643, %v651
    %v656 = vsub.f32 %v646, %v654
    %v657 = vmul.f32 %v655, 1.442695
    %v658 = vpow.pop %v657
    %v659 = vmul.f32 %v656, 1.442695
    %v660 = vpow.pop %v659
    %v661 = vsel %vm179, %v658, 0.0
    %662 = vadd.xlane.f32.xlu0 %v661
    %v663 = vpop.xlane.xlu0 %662
    %v664 = vsel %vm179, %v660, 0.0
    %665 = vadd.xlane.f32.xlu0 %v664
    %v666 = vpop.xlane.xlu0 %665
    %v667 = vrcp.pop %v663
    %v668 = vrcp.pop %v666
    %v669 = vmul.f32 %v658, %v667
    %v670 = vmul.f32 %v660, %v668
    %v671 = vpack.c.bf16 %v670, %v669
    %672 = vrot.lane.b32.xlu0 %v250, 80
    %v673 = vpop.permute.xlu0 %672
    %v676 = vsel %vm179, %v671, 0
    %678 = vmatprep.subr.bf16.mxu0 0
    %679 = vmatpush1.bf16.msra.mxu0 %v673
    %680 = vmatprep.subr.bf16.mxu0 0
    %681 = vmatpush1.bf16.msra.mxu0 0
    %682 = vmatprep.subr.bf16.mxu0 0
    %683 = vmatpush1.bf16.msra.mxu0 0
    %684 = vmatprep.subr.bf16.mxu0 0
    %685 = vmatpush1.bf16.msra.mxu0 0
    %686 = vmatprep.subr.bf16.mxu0 0
    %687 = vmatpush1.bf16.msra.mxu0 0
    %688 = vmatprep.subr.bf16.mxu0 0
    %689 = vmatpush1.bf16.msra.mxu0 0
    %690 = vmatprep.subr.bf16.mxu0 0
    %691 = vmatpush1.bf16.msra.mxu0 0
    %692 = vmatprep.subr.bf16.mxu0 0
    %693 = vmatpush1.bf16.msra.mxu0 0
    %694 = vmatprep.subr.bf16.mxu0 0
    %695 = vmatpush1.bf16.msra.mxu0 0
    %696 = vmatprep.subr.bf16.mxu0 0
    %697 = vmatpush1.bf16.msra.mxu0 0
    %698 = vmatprep.subr.bf16.mxu0 0
    %699 = vmatpush1.bf16.msra.mxu0 0
    %700 = vmatprep.subr.bf16.mxu0 0
    %701 = vmatpush1.bf16.msra.mxu0 0
    %702 = vmatprep.subr.bf16.mxu0 0
    %703 = vmatpush1.bf16.msra.mxu0 0
    %704 = vmatprep.subr.bf16.mxu0 0
    %705 = vmatpush1.bf16.msra.mxu0 0
    %706 = vmatprep.subr.bf16.mxu0 0
    %707 = vmatpush1.bf16.msra.mxu0 0
    %708 = vmatprep.subr.bf16.mxu0 0
    %709 = vmatpush1.bf16.msra.mxu0 0
    %710 = vmatprep.mubr.bf16.mxu0 0
    %711 = vmatmul.mubr.bf16.gmra.mrb[0].mxu0 %v676
    %v712 = vpop.f32.mrb[0].mxu0
    %v713 = vadd.f32 0.0, %v712
    %v714 = vpop.f32.mrb[0].mxu0
    %v715 = vpop.f32.mrb[0].mxu0
    %v716 = vadd.f32 0.0, %v715
    %v717 = vpop.f32.mrb[0].mxu0
    %718 = vdwg.mxu0
    %v719 = vpack.c.bf16 %v716, %v713
    %720 = vrot.lane.b32.xlu0 %v100, 16
    %v721 = vpop.permute.xlu0 %720
    %722 = vrot.lane.b32.xlu0 %v102, 16
    %v723 = vpop.permute.xlu0 %722
    %v725 = vsel %vm179, %v719, 0
    %v728 = vsel %vm179, %v721, 0
    %v731 = vsel %vm179, %v723, 0
    %733 = vmatprep.subr.bf16.mxu0 0
    %734 = vmatpush1.bf16.xpose.msra.mxu0 %v728
    %735 = vmatprep.subr.bf16.mxu0 0
    %736 = vmatpush1.bf16.xpose.msra.mxu0 %v731
    %737 = vmatprep.subr.bf16.mxu0 0
    %738 = vmatpush1.bf16.xpose.msra.mxu0 0
    %739 = vmatprep.subr.bf16.mxu0 0
    %740 = vmatpush1.bf16.xpose.msra.mxu0 0
    %741 = vmatprep.subr.bf16.mxu0 0
    %742 = vmatpush1.bf16.xpose.msra.mxu0 0
    %743 = vmatprep.subr.bf16.mxu0 0
    %744 = vmatpush1.bf16.xpose.msra.mxu0 0
    %745 = vmatprep.subr.bf16.mxu0 0
    %746 = vmatpush1.bf16.xpose.msra.mxu0 0
    %747 = vmatprep.subr.bf16.mxu0 0
    %748 = vmatpush1.bf16.xpose.msra.mxu0 0
    %749 = vmatprep.subr.bf16.mxu0 0
    %750 = vmatpush1.bf16.xpose.msra.mxu0 0
    %751 = vmatprep.subr.bf16.mxu0 0
    %752 = vmatpush1.bf16.xpose.msra.mxu0 0
    %753 = vmatprep.subr.bf16.mxu0 0
    %754 = vmatpush1.bf16.xpose.msra.mxu0 0
    %755 = vmatprep.subr.bf16.mxu0 0
    %756 = vmatpush1.bf16.xpose.msra.mxu0 0
    %757 = vmatprep.subr.bf16.mxu0 0
    %758 = vmatpush1.bf16.xpose.msra.mxu0 0
    %759 = vmatprep.subr.bf16.mxu0 0
    %760 = vmatpush1.bf16.xpose.msra.mxu0 0
    %761 = vmatprep.subr.bf16.mxu0 0
    %762 = vmatpush1.bf16.xpose.msra.mxu0 0
    %763 = vmatprep.subr.bf16.mxu0 0
    %764 = vmatpush1.bf16.xpose.msra.mxu0 0
    %765 = vmatprep.mubr.bf16.mxu0 0
    %766 = vmatmul.mubr.bf16.gmra.mrb[0].mxu0 %v725
    %v767 = vpop.f32.mrb[0].mxu0
    %v768 = vadd.f32 0.0, %v767
    %v769 = vpop.f32.mrb[0].mxu0
    %v770 = vpop.f32.mrb[0].mxu0
    %v771 = vadd.f32 0.0, %v770
    %v772 = vpop.f32.mrb[0].mxu0
    %773 = vdwg.mxu0
    %774 = vrot.lane.b32.xlu0 %v100, 64
    %v775 = vpop.permute.xlu0 %774
    %776 = vrot.lane.b32.xlu0 %v102, 64
    %v777 = vpop.permute.xlu0 %776
    %v779 = vsel %vm179, %v295, 0
    %v782 = vsel %vm179, %v775, 0
    %v785 = vsel %vm179, %v777, 0
    %787 = vmatprep.subr.bf16.mxu0 0
    %788 = vmatpush1.bf16.xpose.msra.mxu0 %v782
    %789 = vmatprep.subr.bf16.mxu0 0
    %790 = vmatpush1.bf16.xpose.msra.mxu0 %v785
    %791 = vmatprep.subr.bf16.mxu0 0
    %792 = vmatpush1.bf16.xpose.msra.mxu0 0
    %793 = vmatprep.subr.bf16.mxu0 0
    %794 = vmatpush1.bf16.xpose.msra.mxu0 0
    %795 = vmatprep.subr.bf16.mxu0 0
    %796 = vmatpush1.bf16.xpose.msra.mxu0 0
    %797 = vmatprep.subr.bf16.mxu0 0
    %798 = vmatpush1.bf16.xpose.msra.mxu0 0
    %799 = vmatprep.subr.bf16.mxu0 0
    %800 = vmatpush1.bf16.xpose.msra.mxu0 0
    %801 = vmatprep.subr.bf16.mxu0 0
    %802 = vmatpush1.bf16.xpose.msra.mxu0 0
    %803 = vmatprep.subr.bf16.mxu0 0
    %804 = vmatpush1.bf16.xpose.msra.mxu0 0
    %805 = vmatprep.subr.bf16.mxu0 0
    %806 = vmatpush1.bf16.xpose.msra.mxu0 0
    %807 = vmatprep.subr.bf16.mxu0 0
    %808 = vmatpush1.bf16.xpose.msra.mxu0 0
    %809 = vmatprep.subr.bf16.mxu0 0
    %810 = vmatpush1.bf16.xpose.msra.mxu0 0
    %811 = vmatprep.subr.bf16.mxu0 0
    %812 = vmatpush1.bf16.xpose.msra.mxu0 0
    %813 = vmatprep.subr.bf16.mxu0 0
    %814 = vmatpush1.bf16.xpose.msra.mxu0 0
    %815 = vmatprep.subr.bf16.mxu0 0
    %816 = vmatpush1.bf16.xpose.msra.mxu0 0
    %817 = vmatprep.subr.bf16.mxu0 0
    %818 = vmatpush1.bf16.xpose.msra.mxu0 0
    %819 = vmatprep.mubr.bf16.mxu0 0
    %820 = vmatmul.mubr.bf16.gmra.mrb[0].mxu0 %v779
    %v821 = vpop.f32.mrb[0].mxu0
    %v822 = vadd.f32 %v470, %v821
    %v823 = vpop.f32.mrb[0].mxu0
    %v824 = vpop.f32.mrb[0].mxu0
    %v825 = vadd.f32 %v473, %v824
    %v826 = vpop.f32.mrb[0].mxu0
    %827 = vdwg.mxu0
    %828 = vrot.lane.b32.xlu0 %v100, 32
    %v829 = vpop.permute.xlu0 %828
    %830 = vrot.lane.b32.xlu0 %v102, 32
    %v831 = vpop.permute.xlu0 %830
    %v833 = vsel %vm179, %v597, 0
    %v836 = vsel %vm179, %v829, 0
    %v839 = vsel %vm179, %v831, 0
    %841 = vmatprep.subr.bf16.mxu0 0
    %842 = vmatpush1.bf16.xpose.msra.mxu0 %v836
    %843 = vmatprep.subr.bf16.mxu0 0
    %844 = vmatpush1.bf16.xpose.msra.mxu0 %v839
    %845 = vmatprep.subr.bf16.mxu0 0
    %846 = vmatpush1.bf16.xpose.msra.mxu0 0
    %847 = vmatprep.subr.bf16.mxu0 0
    %848 = vmatpush1.bf16.xpose.msra.mxu0 0
    %849 = vmatprep.subr.bf16.mxu0 0
    %850 = vmatpush1.bf16.xpose.msra.mxu0 0
    %851 = vmatprep.subr.bf16.mxu0 0
    %852 = vmatpush1.bf16.xpose.msra.mxu0 0
    %853 = vmatprep.subr.bf16.mxu0 0
    %854 = vmatpush1.bf16.xpose.msra.mxu0 0
    %855 = vmatprep.subr.bf16.mxu0 0
    %856 = vmatpush1.bf16.xpose.msra.mxu0 0
    %857 = vmatprep.subr.bf16.mxu0 0
    %858 = vmatpush1.bf16.xpose.msra.mxu0 0
    %859 = vmatprep.subr.bf16.mxu0 0
    %860 = vmatpush1.bf16.xpose.msra.mxu0 0
    %861 = vmatprep.subr.bf16.mxu0 0
    %862 = vmatpush1.bf16.xpose.msra.mxu0 0
    %863 = vmatprep.subr.bf16.mxu0 0
    %864 = vmatpush1.bf16.xpose.msra.mxu0 0
    %865 = vmatprep.subr.bf16.mxu0 0
    %866 = vmatpush1.bf16.xpose.msra.mxu0 0
    %867 = vmatprep.subr.bf16.mxu0 0
    %868 = vmatpush1.bf16.xpose.msra.mxu0 0
    %869 = vmatprep.subr.bf16.mxu0 0
    %870 = vmatpush1.bf16.xpose.msra.mxu0 0
    %871 = vmatprep.subr.bf16.mxu0 0
    %872 = vmatpush1.bf16.xpose.msra.mxu0 0
    %873 = vmatprep.mubr.bf16.mxu0 0
    %874 = vmatmul.mubr.bf16.gmra.mrb[0].mxu0 %v833
    %v875 = vpop.f32.mrb[0].mxu0
    %v876 = vadd.f32 %v768, %v875
    %v877 = vpop.f32.mrb[0].mxu0
    %v878 = vpop.f32.mrb[0].mxu0
    %v879 = vadd.f32 %v771, %v878
    %v880 = vpop.f32.mrb[0].mxu0
    %881 = vdwg.mxu0
    %v882 = vadd.f32 %v822, %v876
    %v883 = vadd.f32 %v825, %v879
    %v884 = vld [vmem:[%s2 + $0x3] sm:$0x1]
    %v885 = vlaneseq
    %v886 = vshrl.u32 %v885, 7
    %v887 = vsub.s32 0, %v886
    %v888 = vrot.slane %v884, %v887
    %v889 = vadd.f32 %v882, %v888
    %v890 = vadd.f32 %v883, %v888
    %891 = vst.msk [vmem:[#allocation7] sm:$0xff] %vm48, %v889
    %892 = vst.msk [vmem:[#allocation7 + $0x8] sm:$0xff] %vm48, %v890
    // Predicated region
    $region22: #{mha_pallas.1} parent=1 // pred_check
      _
    $region23: #{mha_pallas.1} parent=1 // pred_check_branch
      %894 = sbr.rel (0) target = $region25
    $region24: #{mha_pallas.1} parent=1 // pred_region
      %s896 = ssub.s32 256, 256
      %897 = vsyncadd [#allocation4], %s896
      %s898 = sshll.u32 [#allocation7], 4
      %s899 = int_to_ptr.vmem [resolvable:$true] %s898
      %904 = dma.vmem_to_hbm [thread:$0]  %s899, 256, %s3, [#allocation4], 128, 128, 8
    $region25: #{mha_pallas.1} parent=1 // pred_fallthru
      _
    // Predicated region
    $region26: #{mha_pallas.1} parent=1 // pred_check
      _
    $region27: #{mha_pallas.1} parent=1 // pred_check_branch
      %906 = sbr.rel (0) target = $region29
    $region28: #{mha_pallas.1} parent=1 // pred_region
      %907 = dma.done [#allocation4], 256
    $region29: #{mha_pallas.1} parent=1 // pred_fallthru
      _
    %908 = vsyncpa [#allocation3], 1
    %909 = vsyncpa [#allocation6], 1
    %910 = vsyncpa [#allocation4], 1

</llo_original>
